<compile_context>
chip_gen: v6e
topology: v6e:2x2x1
jax: 0.10.0
libtpu: 0.0.40
codegen_flags: <defaults>
</compile_context>

<pallas_src>
import functools

import jax
import jax.numpy as jnp
import numpy as np
from jax.experimental import pallas as pl
from jax.experimental.pallas import tpu as pltpu


def _cosface_kernel(alpha_ref, lab_ref, f_ref, c_ref, o_ref,
                    fn_scr, m_scr, l_scr, t_scr, *, margin, scale, block_c):
    k = pl.program_id(1)
    nc = pl.num_programs(1)

    # First class-tile for this batch-tile: normalize features (cached in bf16
    # scratch, reused for all class tiles) and reset the online-softmax state.
    @pl.when(k == 0)
    def _init():
        f = f_ref[...].astype(jnp.float32)                       # (TB, D)
        ss = jnp.sum(f * f, axis=1, keepdims=True)
        inv = jax.lax.rsqrt(jnp.maximum(ss, 1e-24))              # == 1/max(||f||,1e-12)
        fn_scr[...] = (f * inv).astype(jnp.bfloat16)
        m_scr[...] = jnp.full_like(m_scr, -jnp.inf)
        l_scr[...] = jnp.zeros_like(l_scr)
        t_scr[...] = jnp.zeros_like(t_scr)

    # Cosine logits for this (batch-tile, class-tile): (TC, TB).
    # Contraction over D; bf16 x bf16 inputs, f32 accumulate on the MXU.
    s = jax.lax.dot_general(
        c_ref[...], fn_scr[...],
        dimension_numbers=(((1,), (1,)), ((), ())),
        preferred_element_type=jnp.float32)                      # (TC, TB)

    alpha = alpha_ref[0]                                         # SMEM scalar
    lab = lab_ref[...]                                           # (1, TB) int32
    cls = k * block_c + jax.lax.broadcasted_iota(jnp.int32, s.shape, 0)
    mask = cls == lab                                            # (TC, TB)

    # dist[mask] = dist[mask] - alpha*margin  (blend form of the margin)
    s = jnp.where(mask, s - alpha * margin, s)
    logits = scale * s                                           # (TC, TB)

    # Online softmax update over the class axis (sublanes -> lane-dense stats).
    m_prev = m_scr[...]
    m_new = jnp.maximum(m_prev, jnp.max(logits, axis=0, keepdims=True))
    p = jnp.exp(logits - m_new)
    l_scr[...] = jnp.exp(m_prev - m_new) * l_scr[...] + jnp.sum(p, axis=0,
                                                                keepdims=True)
    m_scr[...] = m_new
    # Exactly one class tile contains each row's label, so the masked sum
    # accumulates the target logit exactly once.
    # TODO(synk): out-of-range labels silently yield target=0 (loss = lse);
    # PyTorch's CrossEntropyLoss would raise instead.
    t_scr[...] = t_scr[...] + jnp.sum(jnp.where(mask, logits, 0.0),
                                      axis=0, keepdims=True)

    # Last class-tile: emit the lane-dense per-sample loss.
    @pl.when(k == nc - 1)
    def _finalize():
        o_ref[...] = (m_scr[...] + jnp.log(l_scr[...])) - t_scr[...]


def cosface_forward(feature, label, centers, *, margin, scale, step=0,
                    annealing_step=200000, block_b=128, block_c=256):
    """Pallas CosFace forward. Returns per-sample cross-entropy loss (B,)."""
    B, D = feature.shape
    C, Dc = centers.shape
    assert D == Dc
    TB = block_b if B % block_b == 0 else B
    TC = block_c if C % block_c == 0 else C
    assert B % TB == 0 and C % TC == 0
    assert TB % 8 == 0 and TC % 8 == 0 and D % 128 == 0, "TPU tile alignment"

    # alpha is a *runtime* scalar handed to the kernel through SMEM, so the
    # kernel never recompiles as the training step advances.
    alpha = jnp.clip(jnp.asarray(step, jnp.float32) / float(annealing_step),
                     0.0, 1.0).reshape(1)

    # Normalize centers once per call in plain XLA and feed bf16 to the MXU
    # (halves the dominant centers DMA bytes; f32 accumulation keeps accuracy).
    c32 = centers.astype(jnp.float32)
    c_norm = jnp.maximum(jnp.sqrt(jnp.sum(c32 * c32, axis=1, keepdims=True)),
                         1e-12)
    centers_n = (c32 / c_norm).astype(jnp.bfloat16)

    label_row = label.reshape(1, B).astype(jnp.int32)

    kernel = functools.partial(_cosface_kernel, margin=float(margin),
                               scale=float(scale), block_c=TC)

    out = pl.pallas_call(
        kernel,
        out_shape=jax.ShapeDtypeStruct((1, B), jnp.float32),
        grid=(B // TB, C // TC),
        in_specs=[
            pl.BlockSpec(memory_space=pltpu.MemorySpace.SMEM),     # alpha
            pl.BlockSpec((1, TB), lambda i, k: (0, i)),            # labels
            pl.BlockSpec((TB, D), lambda i, k: (i, 0)),            # feature
            pl.BlockSpec((TC, D), lambda i, k: (k, 0)),            # centers (bf16)
        ],
        out_specs=pl.BlockSpec((1, TB), lambda i, k: (0, i)),      # loss (lane-dense)
        scratch_shapes=[
            pltpu.VMEM((TB, D), jnp.bfloat16),   # normalized feature cache
            pltpu.VMEM((1, TB), jnp.float32),    # running max
            pltpu.VMEM((1, TB), jnp.float32),    # running sum(exp)
            pltpu.VMEM((1, TB), jnp.float32),    # target logit
        ],
        compiler_params=pltpu.CompilerParams(
            dimension_semantics=("parallel", "arbitrary"),
            vmem_limit_bytes=32 * 1024 * 1024,
        ),
    )(alpha, label_row, feature, centers_n)
    return out.reshape(B)


def _reference(feature, label, centers, *, margin, scale, alpha):
    fn = feature / jnp.maximum(
        jnp.linalg.norm(feature, axis=1, keepdims=True), 1e-12)
    cn = centers / jnp.maximum(
        jnp.linalg.norm(centers, axis=1, keepdims=True), 1e-12)
    dist = fn @ cn.T
    onehot = jax.nn.one_hot(label, centers.shape[0], dtype=jnp.float32)
    dist = dist - alpha * margin * onehot
    logits = scale * dist
    lse = jax.scipy.special.logsumexp(logits, axis=1)
    tgt = jnp.take_along_axis(logits, label[:, None], axis=1)[:, 0]
    return lse - tgt


if __name__ == "__main__":
    # Module config (synthetic, deterministic init). Sizes chosen small but
    # still exercising both grid axes: (B/TB, C/TC) = (2, 2).
    dim_feature = 128
    num_classes = 512
    batch = 256
    margin = 0.35
    scale = 64.0
    step = 100_000              # -> alpha = 0.5 (exercises the margin path)
    annealing_step = 200_000

    key = jax.random.PRNGKey(0)
    k_feat, k_cent, k_lab = jax.random.split(key, 3)

    # Parameter: centers = F.normalize(randn(num_classes, dim_feature), dim=1)
    centers_raw = jax.random.normal(k_cent, (num_classes, dim_feature),
                                    jnp.float32)
    centers = centers_raw / jnp.maximum(
        jnp.linalg.norm(centers_raw, axis=1, keepdims=True), 1e-12)

    feature = jax.random.normal(k_feat, (batch, dim_feature), jnp.float32)
    label = jax.random.randint(k_lab, (batch,), 0, num_classes, jnp.int32)

    loss = cosface_forward(feature, label, centers, margin=margin, scale=scale,
                           step=step, annealing_step=annealing_step)
    loss = jax.block_until_ready(loss)

    alpha = max(min(step / annealing_step, 1.0), 0.0)
    ref = _reference(feature, label, centers, margin=margin, scale=scale,
                     alpha=alpha)
    # bf16 MXU inputs (f32 accumulate) -> loosened tolerance vs f32 reference.
    np.testing.assert_allclose(np.asarray(loss), np.asarray(ref),
                               rtol=2e-2, atol=2e-1)

    print("KERNEL_OK")
</pallas_src>

<mosaic_0001>
module attributes {stable_mosaic.version = 11 : i64} {
  func.func @_cosface_kernel(%arg0: i32, %arg1: i32, %arg2: memref<1xf32, #tpu.memory_space<smem>>, %arg3: memref<1x128xi32, #tpu.memory_space<vmem>>, %arg4: memref<128x128xf32, #tpu.memory_space<vmem>>, %arg5: memref<256x128xbf16, #tpu.memory_space<vmem>>, %arg6: memref<1x128xf32, #tpu.memory_space<vmem>>, %arg7: memref<128x128xbf16, #tpu.memory_space<vmem>>, %arg8: memref<1x128xf32, #tpu.memory_space<vmem>>, %arg9: memref<1x128xf32, #tpu.memory_space<vmem>>, %arg10: memref<1x128xf32, #tpu.memory_space<vmem>>) attributes {dimension_semantics = [#tpu.dimension_semantics<parallel>, #tpu.dimension_semantics<arbitrary>], iteration_bounds = array<i64: 2, 2>, scalar_prefetch = 0 : i64, scratch_operands = 4 : i64, tpu.core_type = #tpu.core_type<tc>, window_params = [{transform_indices = @transform_0, window_bounds = array<i64: 1>}, {transform_indices = @transform_1, window_bounds = array<i64: 1, 128>}, {transform_indices = @transform_2, window_bounds = array<i64: 128, 128>}, {transform_indices = @transform_3, window_bounds = array<i64: 256, 128>}, {transform_indices = @transform_4, window_bounds = array<i64: 1, 128>}]} {
    %c0_i32 = arith.constant 0 : i32
    %0 = arith.cmpi eq, %arg1, %c0_i32 : i32
    %1 = arith.extui %0 : i1 to i32
    %c0_i32_0 = arith.constant 0 : i32
    %2 = arith.cmpi ne, %1, %c0_i32_0 : i32
    scf.if %2 {
      %c0_26 = arith.constant 0 : index
      %c0_27 = arith.constant 0 : index
      %46 = vector.load %arg4[%c0_26, %c0_27] : memref<128x128xf32, #tpu.memory_space<vmem>>, vector<128x128xf32>
      %47 = arith.mulf %46, %46 : vector<128x128xf32>
      %cst_28 = arith.constant dense<0.000000e+00> : vector<128xf32>
      %48 = vector.multi_reduction <add>, %47, %cst_28 [1] : vector<128x128xf32> to vector<128xf32>
      %49 = vector.shape_cast %48 : vector<128xf32> to vector<128x1xf32>
      %cst_29 = arith.constant 1.000000e-24 : f32
      %50 = vector.broadcast %cst_29 : f32 to vector<128x1xf32>
      %51 = arith.maximumf %49, %50 : vector<128x1xf32>
      %52 = math.rsqrt %51 : vector<128x1xf32>
      %53 = vector.broadcast %52 : vector<128x1xf32> to vector<128x128xf32>
      %54 = arith.mulf %46, %53 : vector<128x128xf32>
      %55 = arith.truncf %54 : vector<128x128xf32> to vector<128x128xbf16>
      %c0_30 = arith.constant 0 : index
      %c0_31 = arith.constant 0 : index
      %56 = vector.load %arg7[%c0_30, %c0_31] : memref<128x128xbf16, #tpu.memory_space<vmem>>, vector<128x128xbf16>
      tpu.vector_store %arg7[%c0_30, %c0_31], %55 {strides = array<i32>} : memref<128x128xbf16, #tpu.memory_space<vmem>>, vector<128x128xbf16>,
      %cst_32 = arith.constant 0xFF800000 : f32
      %57 = vector.broadcast %cst_32 : f32 to vector<1x128xf32>
      %c0_33 = arith.constant 0 : index
      %c0_34 = arith.constant 0 : index
      %58 = vector.load %arg8[%c0_33, %c0_34] : memref<1x128xf32, #tpu.memory_space<vmem>>, vector<1x128xf32>
      tpu.vector_store %arg8[%c0_33, %c0_34], %57 {strides = array<i32>} : memref<1x128xf32, #tpu.memory_space<vmem>>, vector<1x128xf32>,
      %cst_35 = arith.constant 0.000000e+00 : f32
      %59 = vector.broadcast %cst_35 : f32 to vector<1x128xf32>
      %c0_36 = arith.constant 0 : index
      %c0_37 = arith.constant 0 : index
      %60 = vector.load %arg9[%c0_36, %c0_37] : memref<1x128xf32, #tpu.memory_space<vmem>>, vector<1x128xf32>
      tpu.vector_store %arg9[%c0_36, %c0_37], %59 {strides = array<i32>} : memref<1x128xf32, #tpu.memory_space<vmem>>, vector<1x128xf32>,
      %cst_38 = arith.constant 0.000000e+00 : f32
      %61 = vector.broadcast %cst_38 : f32 to vector<1x128xf32>
      %c0_39 = arith.constant 0 : index
      %c0_40 = arith.constant 0 : index
      %62 = vector.load %arg10[%c0_39, %c0_40] : memref<1x128xf32, #tpu.memory_space<vmem>>, vector<1x128xf32>
      tpu.vector_store %arg10[%c0_39, %c0_40], %61 {strides = array<i32>} : memref<1x128xf32, #tpu.memory_space<vmem>>, vector<1x128xf32>,
    } else {
    }
    %c0 = arith.constant 0 : index
    %c0_1 = arith.constant 0 : index
    %3 = vector.load %arg5[%c0, %c0_1] : memref<256x128xbf16, #tpu.memory_space<vmem>>, vector<256x128xbf16>
    %c0_2 = arith.constant 0 : index
    %c0_3 = arith.constant 0 : index
    %4 = vector.load %arg7[%c0_2, %c0_3] : memref<128x128xbf16, #tpu.memory_space<vmem>>, vector<128x128xbf16>
    %cst = arith.constant dense<0.000000e+00> : vector<256x128xf32>
    %5 = tpu.matmul %3, %4, %cst {dimension_numbers = #tpu.dot_dimension_numbers<[1], [1], [0], [0], [0, 0, 1, 0], [], []>} : vector<256x128xbf16>, vector<128x128xbf16>, vector<256x128xf32> -> vector<256x128xf32>
    %c0_4 = arith.constant 0 : index
    %6 = memref.load %arg2[%c0_4] : memref<1xf32, #tpu.memory_space<smem>>
    %c0_5 = arith.constant 0 : index
    %c0_6 = arith.constant 0 : index
    %7 = vector.load %arg3[%c0_5, %c0_6] : memref<1x128xi32, #tpu.memory_space<vmem>>, vector<1x128xi32>
    %c256_i32 = arith.constant 256 : i32
    %8 = arith.muli %arg1, %c256_i32 : i32
    %9 = tpu.iota {dimensions = array<i32: 0>} : vector<256x128xi32>
    %10 = vector.broadcast %8 : i32 to vector<256x128xi32>
    %11 = arith.addi %10, %9 : vector<256x128xi32>
    %12 = vector.broadcast %7 : vector<1x128xi32> to vector<256x128xi32>
    %13 = arith.cmpi eq, %11, %12 : vector<256x128xi32>
    %cst_7 = arith.constant 3.500000e-01 : f32
    %14 = arith.mulf %6, %cst_7 : f32
    %15 = vector.broadcast %14 : f32 to vector<256x128xf32>
    %16 = arith.subf %5, %15 : vector<256x128xf32>
    %17 = arith.select %13, %16, %5 : vector<256x128xi1>, vector<256x128xf32>
    %cst_8 = arith.constant 6.400000e+01 : f32
    %18 = vector.broadcast %cst_8 : f32 to vector<256x128xf32>
    %19 = arith.mulf %18, %17 : vector<256x128xf32>
    %c0_9 = arith.constant 0 : index
    %c0_10 = arith.constant 0 : index
    %20 = vector.load %arg8[%c0_9, %c0_10] : memref<1x128xf32, #tpu.memory_space<vmem>>, vector<1x128xf32>
    %cst_11 = arith.constant dense<0xFF800000> : vector<128xf32>
    %21 = vector.multi_reduction <maximumf>, %19, %cst_11 [0] : vector<256x128xf32> to vector<128xf32>
    %22 = vector.shape_cast %21 : vector<128xf32> to vector<1x128xf32>
    %23 = arith.maximumf %20, %22 : vector<1x128xf32>
    %24 = vector.broadcast %23 : vector<1x128xf32> to vector<256x128xf32>
    %25 = arith.subf %19, %24 : vector<256x128xf32>
    %26 = math.exp %25 : vector<256x128xf32>
    %27 = arith.subf %20, %23 : vector<1x128xf32>
    %28 = math.exp %27 : vector<1x128xf32>
    %c0_12 = arith.constant 0 : index
    %c0_13 = arith.constant 0 : index
    %29 = vector.load %arg9[%c0_12, %c0_13] : memref<1x128xf32, #tpu.memory_space<vmem>>, vector<1x128xf32>
    %30 = arith.mulf %28, %29 : vector<1x128xf32>
    %cst_14 = arith.constant dense<0.000000e+00> : vector<128xf32>
    %31 = vector.multi_reduction <add>, %26, %cst_14 [0] : vector<256x128xf32> to vector<128xf32>
    %32 = vector.shape_cast %31 : vector<128xf32> to vector<1x128xf32>
    %33 = arith.addf %30, %32 : vector<1x128xf32>
    %c0_15 = arith.constant 0 : index
    %c0_16 = arith.constant 0 : index
    %34 = vector.load %arg9[%c0_15, %c0_16] : memref<1x128xf32, #tpu.memory_space<vmem>>, vector<1x128xf32>
    tpu.vector_store %arg9[%c0_15, %c0_16], %33 {strides = array<i32>} : memref<1x128xf32, #tpu.memory_space<vmem>>, vector<1x128xf32>,
    %c0_17 = arith.constant 0 : index
    %c0_18 = arith.constant 0 : index
    %35 = vector.load %arg8[%c0_17, %c0_18] : memref<1x128xf32, #tpu.memory_space<vmem>>, vector<1x128xf32>
    tpu.vector_store %arg8[%c0_17, %c0_18], %23 {strides = array<i32>} : memref<1x128xf32, #tpu.memory_space<vmem>>, vector<1x128xf32>,
    %c0_19 = arith.constant 0 : index
    %c0_20 = arith.constant 0 : index
    %36 = vector.load %arg10[%c0_19, %c0_20] : memref<1x128xf32, #tpu.memory_space<vmem>>, vector<1x128xf32>
    %cst_21 = arith.constant 0.000000e+00 : f32
    %37 = vector.broadcast %cst_21 : f32 to vector<256x128xf32>
    %38 = arith.select %13, %19, %37 : vector<256x128xi1>, vector<256x128xf32>
    %cst_22 = arith.constant dense<0.000000e+00> : vector<128xf32>
    %39 = vector.multi_reduction <add>, %38, %cst_22 [0] : vector<256x128xf32> to vector<128xf32>
    %40 = vector.shape_cast %39 : vector<128xf32> to vector<1x128xf32>
    %41 = arith.addf %36, %40 : vector<1x128xf32>
    %c0_23 = arith.constant 0 : index
    %c0_24 = arith.constant 0 : index
    %42 = vector.load %arg10[%c0_23, %c0_24] : memref<1x128xf32, #tpu.memory_space<vmem>>, vector<1x128xf32>
    tpu.vector_store %arg10[%c0_23, %c0_24], %41 {strides = array<i32>} : memref<1x128xf32, #tpu.memory_space<vmem>>, vector<1x128xf32>,
    %c1_i32 = arith.constant 1 : i32
    %43 = arith.cmpi eq, %arg1, %c1_i32 : i32
    %44 = arith.extui %43 : i1 to i32
    %c0_i32_25 = arith.constant 0 : i32
    %45 = arith.cmpi ne, %44, %c0_i32_25 : i32
    scf.if %45 {
      %c0_26 = arith.constant 0 : index
      %c0_27 = arith.constant 0 : index
      %46 = vector.load %arg8[%c0_26, %c0_27] : memref<1x128xf32, #tpu.memory_space<vmem>>, vector<1x128xf32>
      %c0_28 = arith.constant 0 : index
      %c0_29 = arith.constant 0 : index
      %47 = vector.load %arg9[%c0_28, %c0_29] : memref<1x128xf32, #tpu.memory_space<vmem>>, vector<1x128xf32>
      %48 = math.log %47 : vector<1x128xf32>
      %49 = arith.addf %46, %48 : vector<1x128xf32>
      %c0_30 = arith.constant 0 : index
      %c0_31 = arith.constant 0 : index
      %50 = vector.load %arg10[%c0_30, %c0_31] : memref<1x128xf32, #tpu.memory_space<vmem>>, vector<1x128xf32>
      %51 = arith.subf %49, %50 : vector<1x128xf32>
      %c0_32 = arith.constant 0 : index
      %c0_33 = arith.constant 0 : index
      %52 = vector.load %arg6[%c0_32, %c0_33] : memref<1x128xf32, #tpu.memory_space<vmem>>, vector<1x128xf32>
      tpu.vector_store %arg6[%c0_32, %c0_33], %51 {strides = array<i32>} : memref<1x128xf32, #tpu.memory_space<vmem>>, vector<1x128xf32>,
    } else {
    }
    return
  }
  func.func @transform_0(%arg0: i32, %arg1: i32) -> i32 {
    %c0_i32 = arith.constant 0 : i32
    %c0_i32_0 = arith.constant 0 : i32
    return %c0_i32 : i32
  }
  func.func @transform_1(%arg0: i32, %arg1: i32) -> (i32, i32) {
    %c0_i32 = arith.constant 0 : i32
    %c0_i32_0 = arith.constant 0 : i32
    return %c0_i32, %arg0 : i32, i32
  }
  func.func @transform_2(%arg0: i32, %arg1: i32) -> (i32, i32) {
    %c0_i32 = arith.constant 0 : i32
    %c0_i32_0 = arith.constant 0 : i32
    return %arg0, %c0_i32 : i32, i32
  }
  func.func @transform_3(%arg0: i32, %arg1: i32) -> (i32, i32) {
    %c0_i32 = arith.constant 0 : i32
    %c0_i32_0 = arith.constant 0 : i32
    return %arg1, %c0_i32 : i32, i32
  }
  func.func @transform_4(%arg0: i32, %arg1: i32) -> (i32, i32) {
    %c0_i32 = arith.constant 0 : i32
    %c0_i32_0 = arith.constant 0 : i32
    return %c0_i32, %arg0 : i32, i32
  }
}

</mosaic_0001>

<llo_original>
// kernel: tpu_custom_call.1
$region0: #{tpu_custom_call.1}
  #allocation0 [shape = 'u32[]', space=smem, size = 0x4, offset = 0x4, fixed_abs, tag = 'smem constant byte address 0x4 - core index']
  #allocation1 [shape = 'u32[144,128]{1,0:T(1,128)}', space=vmem, size = 0x12000, scoped, tag = 'internal scratch']
  #allocation2 [shape = 'bf16[128,128]{1,0:T(8,128)(2,1)}', space=vmem, size = 0x8000, scoped, tag = 'scratch operand']
  #allocation3 [shape = 'f32[1,128]{1,0:T(1,128)}', space=vmem, size = 0x200, scoped, tag = 'scratch operand']
  #allocation4 [shape = 'f32[1,128]{1,0:T(1,128)}', space=vmem, size = 0x200, scoped, tag = 'scratch operand']
  #allocation5 [shape = 'f32[1,128]{1,0:T(1,128)}', space=vmem, size = 0x200, scoped, tag = 'scratch operand']
  #allocation6 [shape = 'f32[1]{0:T(128)S(6)}', space=smem, size = 0x200, scoped, tag = 'scoped memory for tpu_custom_call.1']
  %s0 = inlined_call_operand.<no memory space> [shape: f32[1], index: 0, kind: input, shape index: {}]
  %s1 = inlined_call_operand.vmem [shape: s32[1,256], index: 1, kind: input, shape index: {}]
  %s2 = inlined_call_operand.hbm [shape: f32[256,128], index: 2, kind: input, shape index: {}]
  %s3 = inlined_call_operand.hbm [shape: bf16[512,128], index: 3, kind: input, shape index: {}]
  %s4 = inlined_call_operand.hbm [shape: f32[1,256], index: 4, kind: output, shape index: {}]
  %s5 = sld [smem:[#allocation0]]
  $region65: #{tpu_custom_call.1} parent=0
    _
  %s7 = ssub.s32 1, %s5
  %s8 = scalar_select 0, %s7, %s5
  %9 = sst [smem:[#allocation6]] %s0
  $region1: #{tpu_custom_call.1} parent=0
    #allocation7 [shape = 'u8[131072]{0}', space=vmem, size = 0x20000, scoped, tag = 'input window, operand 2']
    #allocation8 [shape = 's32[2]{0}', space=sflag, size = 0x8, scoped, tag = 'scoped memory for tpu_custom_call.1']
    #allocation9 [shape = 's32[2]{0}', space=sflag, size = 0x8, scoped, tag = 'scoped memory for tpu_custom_call.1']
    #allocation10 [shape = 'u8[131072]{0}', space=vmem, size = 0x20000, scoped, tag = 'input window, operand 3']
    #allocation11 [shape = 's32[2]{0}', space=sflag, size = 0x8, scoped, tag = 'scoped memory for tpu_custom_call.1']
    #allocation12 [shape = 'u8[1024]{0}', space=vmem, size = 0x400, scoped, tag = 'output window, operand 0']
    %10 = vsyncpa [#allocation8], 0
    %s11 = scalar_lea.sflag [#allocation8], 1
    %12 = vsyncpa %s11, 0
    %13 = vsyncpa [#allocation11], 0
    %s14 = scalar_lea.sflag [#allocation11], 1
    %15 = vsyncpa %s14, 0
    %16 = vsyncpa [#allocation9], 0
    %s17 = scalar_lea.sflag [#allocation9], 1
    %18 = vsyncpa %s17, 0
    loop: start=0, step=1, limit=6
    $region2: #{tpu_custom_call.1} parent=1 // loop_pre_header
      _
    $region3: #{tpu_custom_call.1} parent=1 // loop_header
      %s20 = sphi 0, %s24
      %p21 = scmp.ge.s32.totalorder %s20, 6
      %s27 = sphi 0, %s39
      %s28 = sphi 0, %s35
      %s29 = sphi 0, %s27
      %s30 = sphi 0, %s28
      %s31 = sphi 0, %s29
      %s32 = sphi 0, %s30
      %s40 = sphi 0, %s40
      %s42 = sphi 0, %s40
      %s43 = sphi 0, %s42
      %s57 = sphi 0, %s43
      %s63 = sphi 0, %s65
      %s66 = sphi 0, %s63
      %s67 = sphi 0, %s66
      %s83 = sphi 0, %s67
      %s89 = sphi 0, %s91
      %s92 = sphi 0, %s89
      %s93 = sphi 0, %s92
      %s109 = sphi 0, %s93
      %s115 = sphi 0, %s117
      %s118 = sphi 0, %s115
      %s119 = sphi 0, %s118
      %s135 = sphi 0, %s119
      %s141 = sphi 0, %s143
      %s144 = sphi 0, %s141
      %s145 = sphi 0, %s144
      %s161 = sphi 0, %s145
    $region4: #{tpu_custom_call.1} parent=1 // loop_header_branch
      %23 = sbr.rel (%p21) target = $region8
    $region5: #{tpu_custom_call.1} parent=1 // loop_body
      %s25 = ssub.s32 %s20, 1
      %s26 = ssub.s32 %s20, 2
      %s33 = sadd.s32 1, %s28
      %p34 = scmp.ge.s32.totalorder %s33, 2
      %s35 = scalar_select %p34, 0, %s33
      %s36 = sadd.s32 1, %s27
      %s37 = scalar_select %p34, %s36, %s27
      %p38 = scmp.ge.s32.totalorder %s37, 2
      %s39 = scalar_select %p38, 0, %s37
      %s41 = sadd.s32 %s40, 1
      %p44 = scmp.eq.s32.totalorder %s20, 3
      %p45 = scmp.ne.s32.totalorder %s40, %s42
      %p46 = scmp.eq.s32.totalorder %s20, 0
      %p47 = por %p45, %p46
      %p48 = scmp.ne.s32.totalorder %s40, %s42
      %p49 = scmp.eq.s32.totalorder %s25, 3
      %p50 = por %p48, %p49
      %p51 = scmp.ne.s32.totalorder %s42, %s43
      %p52 = scmp.eq.s32.totalorder %s25, 0
      %p53 = por %p51, %p52
      %p54 = scmp.ne.s32.totalorder %s42, %s43
      %p55 = scmp.eq.s32.totalorder %s26, 3
      %p56 = por %p54, %p55
      %p58 = scmp.ne.s32.totalorder %s43, %s57
      %p59 = scmp.eq.s32.totalorder %s26, 0
      %p60 = por %p58, %p59
      %s61 = ssub.s32 %s27, %s39
      %p62 = scmp.eq.s32.totalorder %s61, 0
      %s64 = sadd.s32 %s63, 1
      %s65 = scalar_select %p62, %s63, %s64
      %p68 = pneg %p62
      %p69 = scmp.eq.s32.totalorder %s20, 3
      %p70 = por %p68, %p69
      %p71 = scmp.ne.s32.totalorder %s63, %s66
      %p72 = scmp.eq.s32.totalorder %s20, 0
      %p73 = por %p71, %p72
      %p74 = scmp.ne.s32.totalorder %s63, %s66
      %p75 = scmp.eq.s32.totalorder %s25, 3
      %p76 = por %p74, %p75
      %p77 = scmp.ne.s32.totalorder %s66, %s67
      %p78 = scmp.eq.s32.totalorder %s25, 0
      %p79 = por %p77, %p78
      %p80 = scmp.ne.s32.totalorder %s66, %s67
      %p81 = scmp.eq.s32.totalorder %s26, 3
      %p82 = por %p80, %p81
      %p84 = scmp.ne.s32.totalorder %s67, %s83
      %p85 = scmp.eq.s32.totalorder %s26, 0
      %p86 = por %p84, %p85
      %s87 = ssub.s32 %s27, %s39
      %p88 = scmp.eq.s32.totalorder %s87, 0
      %s90 = sadd.s32 %s89, 1
      %s91 = scalar_select %p88, %s89, %s90
      %p94 = pneg %p88
      %p95 = scmp.eq.s32.totalorder %s20, 3
      %p96 = por %p94, %p95
      %p97 = scmp.ne.s32.totalorder %s89, %s92
      %p98 = scmp.eq.s32.totalorder %s20, 0
      %p99 = por %p97, %p98
      %p100 = scmp.ne.s32.totalorder %s89, %s92
      %p101 = scmp.eq.s32.totalorder %s25, 3
      %p102 = por %p100, %p101
      %p103 = scmp.ne.s32.totalorder %s92, %s93
      %p104 = scmp.eq.s32.totalorder %s25, 0
      %p105 = por %p103, %p104
      %p106 = scmp.ne.s32.totalorder %s92, %s93
      %p107 = scmp.eq.s32.totalorder %s26, 3
      %p108 = por %p106, %p107
      %p110 = scmp.ne.s32.totalorder %s93, %s109
      %p111 = scmp.eq.s32.totalorder %s26, 0
      %p112 = por %p110, %p111
      %s113 = ssub.s32 %s28, %s35
      %p114 = scmp.eq.s32.totalorder %s113, 0
      %s116 = sadd.s32 %s115, 1
      %s117 = scalar_select %p114, %s115, %s116
      %p120 = pneg %p114
      %p121 = scmp.eq.s32.totalorder %s20, 3
      %p122 = por %p120, %p121
      %p123 = scmp.ne.s32.totalorder %s115, %s118
      %p124 = scmp.eq.s32.totalorder %s20, 0
      %p125 = por %p123, %p124
      %p126 = scmp.ne.s32.totalorder %s115, %s118
      %p127 = scmp.eq.s32.totalorder %s25, 3
      %p128 = por %p126, %p127
      %p129 = scmp.ne.s32.totalorder %s118, %s119
      %p130 = scmp.eq.s32.totalorder %s25, 0
      %p131 = por %p129, %p130
      %p132 = scmp.ne.s32.totalorder %s118, %s119
      %p133 = scmp.eq.s32.totalorder %s26, 3
      %p134 = por %p132, %p133
      %p136 = scmp.ne.s32.totalorder %s119, %s135
      %p137 = scmp.eq.s32.totalorder %s26, 0
      %p138 = por %p136, %p137
      %s139 = ssub.s32 %s27, %s39
      %p140 = scmp.eq.s32.totalorder %s139, 0
      %s142 = sadd.s32 %s141, 1
      %s143 = scalar_select %p140, %s141, %s142
      %p146 = pneg %p140
      %p147 = scmp.eq.s32.totalorder %s20, 3
      %p148 = por %p146, %p147
      %p149 = scmp.ne.s32.totalorder %s141, %s144
      %p150 = scmp.eq.s32.totalorder %s20, 0
      %p151 = por %p149, %p150
      %p152 = scmp.ne.s32.totalorder %s141, %s144
      %p153 = scmp.eq.s32.totalorder %s25, 3
      %p154 = por %p152, %p153
      %p155 = scmp.ne.s32.totalorder %s144, %s145
      %p156 = scmp.eq.s32.totalorder %s25, 0
      %p157 = por %p155, %p156
      %p158 = scmp.ne.s32.totalorder %s144, %s145
      %p159 = scmp.eq.s32.totalorder %s26, 3
      %p160 = por %p158, %p159
      %p162 = scmp.ne.s32.totalorder %s145, %s161
      %p163 = scmp.eq.s32.totalorder %s26, 0
      %p164 = por %p162, %p163
      %p165 = scmp.le.s32.totalorder 1, %s20
      %p166 = scmp.lt.s32.totalorder %s20, 5
      %p167 = pnand %p165, %p166
      %p168 = pneg %p167
      // Predicated region
      $region9: #{tpu_custom_call.1} parent=5 // pred_check
        _
      $region10: #{tpu_custom_call.1} parent=5 // pred_check_branch
        %170 = sbr.rel (%p167) target = $region12
      $region11: #{tpu_custom_call.1} parent=5 // pred_region
        %s171 = ssub.s32 %s20, 1
        // Predicated region
        $region13: #{tpu_custom_call.1} parent=11 // pred_check
          %p172 = pneg %p53
        $region14: #{tpu_custom_call.1} parent=11 // pred_check_branch
          %174 = sbr.rel (%p172) target = $region16
        $region15: #{tpu_custom_call.1} parent=11 // pred_region
          _
        $region16: #{tpu_custom_call.1} parent=11 // pred_fallthru
          _
      $region12: #{tpu_custom_call.1} parent=5 // pred_fallthru
        _
      %p175 = scmp.lt.s32.totalorder %s20, 4
      // Predicated region
      $region17: #{tpu_custom_call.1} parent=5 // pred_check
        %p176 = pneg %p175
      $region18: #{tpu_custom_call.1} parent=5 // pred_check_branch
        %178 = sbr.rel (%p176) target = $region20
      $region19: #{tpu_custom_call.1} parent=5 // pred_region
        // Predicated region
        $region21: #{tpu_custom_call.1} parent=19 // pred_check
          %p179 = pneg %p73
        $region22: #{tpu_custom_call.1} parent=19 // pred_check_branch
          %181 = sbr.rel (%p179) target = $region24
        $region23: #{tpu_custom_call.1} parent=19 // pred_region
          %p182 = scmp.lt.s32.totalorder %s27, 1
          %s183 = scalar_select %p182, %s27, 1
          %s184 = scalar_lea.vmem %s1, %s183
        $region24: #{tpu_custom_call.1} parent=19 // pred_fallthru
          _
        // Predicated region
        $region25: #{tpu_custom_call.1} parent=19 // pred_check
          %p185 = pneg %p99
        $region26: #{tpu_custom_call.1} parent=19 // pred_check_branch
          %187 = sbr.rel (%p185) target = $region28
        $region27: #{tpu_custom_call.1} parent=19 // pred_region
          %s188 = sand.u32 %s89, 1
          %s189 = scalar_lea.sflag [#allocation8], %s188
          %s190 = sand.u32 %s89, 1
          %s191 = smul.addr %s190, 128
          %s192 = scalar_lea.vmem [#allocation7], %s191
          %s193 = smul.u32 16, %s27
          %s195 = ssub.s32 2048, 2048
          %196 = vsyncadd %s189, %s195
          %s197 = smul.addr %s193, 128
          %s198 = scalar_lea.hbm %s2, %s197
          %s199 = sshll.u32 %s192, 4
          %s200 = int_to_ptr.vmem [resolvable:$true] %s199
          %205 = dma.hbm_to_vmem [thread:$0]  %s198, 2048, %s200, %s189, 128, 128, 8
        $region28: #{tpu_custom_call.1} parent=19 // pred_fallthru
          _
        // Predicated region
        $region29: #{tpu_custom_call.1} parent=19 // pred_check
          %p206 = pneg %p125
        $region30: #{tpu_custom_call.1} parent=19 // pred_check_branch
          %208 = sbr.rel (%p206) target = $region32
        $region31: #{tpu_custom_call.1} parent=19 // pred_region
          %s209 = sand.u32 %s115, 1
          %s210 = scalar_lea.sflag [#allocation11], %s209
          %s211 = sand.u32 %s115, 1
          %s212 = smul.addr %s211, 128
          %s213 = scalar_lea.vmem [#allocation10], %s212
          %s214 = smul.u32 32, %s28
          %s216 = ssub.s32 2048, 2048
          %217 = vsyncadd %s210, %s216
          %s218 = smul.addr %s214, 64
          %s219 = scalar_lea.hbm %s3, %s218
          %s220 = sshll.u32 %s213, 4
          %s221 = int_to_ptr.vmem [resolvable:$true] %s220
          %226 = dma.hbm_to_vmem [thread:$0]  %s219, 2048, %s221, %s210, 64, 64, 4
        $region32: #{tpu_custom_call.1} parent=19 // pred_fallthru
          _
      $region20: #{tpu_custom_call.1} parent=5 // pred_fallthru
        _
      %p227 = scmp.le.s32.totalorder 1, %s20
      %p228 = scmp.lt.s32.totalorder %s20, 5
      %p229 = pnand %p227, %p228
      %p230 = pneg %p229
      // Predicated region
      $region33: #{tpu_custom_call.1} parent=5 // pred_check
        _
      $region34: #{tpu_custom_call.1} parent=5 // pred_check_branch
        %232 = sbr.rel (%p229) target = $region36
      $region35: #{tpu_custom_call.1} parent=5 // pred_region
        %s233 = ssub.s32 %s20, 1
        %s234 = sand.u32 %s92, 1
        %s235 = scalar_lea.sflag [#allocation8], %s234
        %s236 = sand.u32 %s92, 1
        %s237 = smul.addr %s236, 128
        %s238 = scalar_lea.vmem [#allocation7], %s237
        // Predicated region
        $region37: #{tpu_custom_call.1} parent=35 // pred_check
          %p239 = pneg %p105
        $region38: #{tpu_custom_call.1} parent=35 // pred_check_branch
          %241 = sbr.rel (%p239) target = $region40
        $region39: #{tpu_custom_call.1} parent=35 // pred_region
          %242 = dma.done %s235, 2048
        $region40: #{tpu_custom_call.1} parent=35 // pred_fallthru
          _
        %s243 = sand.u32 %s118, 1
        %s244 = scalar_lea.sflag [#allocation11], %s243
        %s245 = sand.u32 %s118, 1
        %s246 = smul.addr %s245, 128
        %s247 = scalar_lea.vmem [#allocation10], %s246
        // Predicated region
        $region41: #{tpu_custom_call.1} parent=35 // pred_check
          %p248 = pneg %p131
        $region42: #{tpu_custom_call.1} parent=35 // pred_check_branch
          %250 = sbr.rel (%p248) target = $region44
        $region43: #{tpu_custom_call.1} parent=35 // pred_region
          %251 = dma.done %s244, 2048
        $region44: #{tpu_custom_call.1} parent=35 // pred_fallthru
          _
        %p252 = pneg %p53
        %p253 = pneg %p50
        %p254 = scmp.lt.s32.totalorder %s29, 1
        %s255 = scalar_select %p254, %s29, 1
        %s256 = scalar_lea.vmem %s1, %s255
        %p257 = pneg %p79
        %p258 = pneg %p76
        %s259 = sand.u32 %s92, 1
        %s260 = scalar_lea.sflag [#allocation8], %s259
        %s261 = sand.u32 %s92, 1
        %s262 = smul.addr %s261, 128
        %s263 = scalar_lea.vmem [#allocation7], %s262
        %p264 = pneg %p105
        %p265 = pneg %p102
        %s266 = sand.u32 %s118, 1
        %s267 = scalar_lea.sflag [#allocation11], %s266
        %s268 = sand.u32 %s118, 1
        %s269 = smul.addr %s268, 128
        %s270 = scalar_lea.vmem [#allocation10], %s269
        %p271 = pneg %p131
        %p272 = pneg %p128
        %p273 = pneg %p157
        %p274 = pneg %p154
        %s275 = sand.u32 %s144, 1
        %s276 = scalar_lea.sflag [#allocation9], %s275
        %s277 = sand.u32 %s144, 1
        %s278 = scalar_lea.vmem [#allocation12], %s277
        %p279 = scmp.lt.s32.totalorder %s29, 1
        %s280 = scalar_select %p279, %s29, 1
        %s281 = scalar_lea.vmem %s1, %s280
        %s282 = smul.u32 16, %s29
        %s283 = smul.u32 32, %s30
        %p285 = scmp.eq.s32.totalorder %s30, 0
        // Predicated region
        $region45: #{tpu_custom_call.1} parent=35 // pred_check
          %p286 = pneg %p285
        $region46: #{tpu_custom_call.1} parent=35 // pred_check_branch
          %288 = sbr.rel (%p286) target = $region48
        $region47: #{tpu_custom_call.1} parent=35 // pred_region
          %v289 = vld [vmem:[%s238] sm:$0xff]
          %v290 = vld [vmem:[%s238 + $0x8] sm:$0xff]
          %v291 = vld [vmem:[%s238 + $0x10] sm:$0xff]
          %v292 = vld [vmem:[%s238 + $0x18] sm:$0xff]
          %v293 = vld [vmem:[%s238 + $0x20] sm:$0xff]
          %v294 = vld [vmem:[%s238 + $0x28] sm:$0xff]
          %v295 = vld [vmem:[%s238 + $0x30] sm:$0xff]
          %v296 = vld [vmem:[%s238 + $0x38] sm:$0xff]
          %v297 = vld [vmem:[%s238 + $0x40] sm:$0xff]
          %v298 = vld [vmem:[%s238 + $0x48] sm:$0xff]
          %v299 = vld [vmem:[%s238 + $0x50] sm:$0xff]
          %v300 = vld [vmem:[%s238 + $0x58] sm:$0xff]
          %v301 = vld [vmem:[%s238 + $0x60] sm:$0xff]
          %v302 = vld [vmem:[%s238 + $0x68] sm:$0xff]
          %v303 = vld [vmem:[%s238 + $0x70] sm:$0xff]
          %v304 = vld [vmem:[%s238 + $0x78] sm:$0xff]
          %v305 = vmul.f32 %v289, %v289
          %v306 = vmul.f32 %v290, %v290
          %v307 = vmul.f32 %v291, %v291
          %v308 = vmul.f32 %v292, %v292
          %v309 = vmul.f32 %v293, %v293
          %v310 = vmul.f32 %v294, %v294
          %v311 = vmul.f32 %v295, %v295
          %v312 = vmul.f32 %v296, %v296
          %v313 = vmul.f32 %v297, %v297
          %v314 = vmul.f32 %v298, %v298
          %v315 = vmul.f32 %v299, %v299
          %v316 = vmul.f32 %v300, %v300
          %v317 = vmul.f32 %v301, %v301
          %v318 = vmul.f32 %v302, %v302
          %v319 = vmul.f32 %v303, %v303
          %v320 = vmul.f32 %v304, %v304
          %321 = vadd.xlane.f32.xlu0 %v305
          %v322 = vpop.xlane.xlu0 %321
          %323 = vadd.xlane.f32.xlu0 %v306
          %v324 = vpop.xlane.xlu0 %323
          %325 = vadd.xlane.f32.xlu0 %v307
          %v326 = vpop.xlane.xlu0 %325
          %327 = vadd.xlane.f32.xlu0 %v308
          %v328 = vpop.xlane.xlu0 %327
          %329 = vadd.xlane.f32.xlu0 %v309
          %v330 = vpop.xlane.xlu0 %329
          %331 = vadd.xlane.f32.xlu0 %v310
          %v332 = vpop.xlane.xlu0 %331
          %333 = vadd.xlane.f32.xlu0 %v311
          %v334 = vpop.xlane.xlu0 %333
          %335 = vadd.xlane.f32.xlu0 %v312
          %v336 = vpop.xlane.xlu0 %335
          %337 = vadd.xlane.f32.xlu0 %v313
          %v338 = vpop.xlane.xlu0 %337
          %339 = vadd.xlane.f32.xlu0 %v314
          %v340 = vpop.xlane.xlu0 %339
          %341 = vadd.xlane.f32.xlu0 %v315
          %v342 = vpop.xlane.xlu0 %341
          %343 = vadd.xlane.f32.xlu0 %v316
          %v344 = vpop.xlane.xlu0 %343
          %345 = vadd.xlane.f32.xlu0 %v317
          %v346 = vpop.xlane.xlu0 %345
          %347 = vadd.xlane.f32.xlu0 %v318
          %v348 = vpop.xlane.xlu0 %347
          %349 = vadd.xlane.f32.xlu0 %v319
          %v350 = vpop.xlane.xlu0 %349
          %351 = vadd.xlane.f32.xlu0 %v320
          %v352 = vpop.xlane.xlu0 %351
          %v353 = vmax.f32 %v322, 1e-24
          %v354 = vmax.f32 %v324, 1e-24
          %v355 = vmax.f32 %v326, 1e-24
          %v356 = vmax.f32 %v328, 1e-24
          %v357 = vmax.f32 %v330, 1e-24
          %v358 = vmax.f32 %v332, 1e-24
          %v359 = vmax.f32 %v334, 1e-24
          %v360 = vmax.f32 %v336, 1e-24
          %v361 = vmax.f32 %v338, 1e-24
          %v362 = vmax.f32 %v340, 1e-24
          %v363 = vmax.f32 %v342, 1e-24
          %v364 = vmax.f32 %v344, 1e-24
          %v365 = vmax.f32 %v346, 1e-24
          %v366 = vmax.f32 %v348, 1e-24
          %v367 = vmax.f32 %v350, 1e-24
          %v368 = vmax.f32 %v352, 1e-24
          %v369 = vrsqrt.pop %v353
          %v370 = vrsqrt.pop %v354
          %v371 = vrsqrt.pop %v355
          %v372 = vrsqrt.pop %v356
          %v373 = vrsqrt.pop %v357
          %v374 = vrsqrt.pop %v358
          %v375 = vrsqrt.pop %v359
          %v376 = vrsqrt.pop %v360
          %v377 = vrsqrt.pop %v361
          %v378 = vrsqrt.pop %v362
          %v379 = vrsqrt.pop %v363
          %v380 = vrsqrt.pop %v364
          %v381 = vrsqrt.pop %v365
          %v382 = vrsqrt.pop %v366
          %v383 = vrsqrt.pop %v367
          %v384 = vrsqrt.pop %v368
          %v385 = vmul.f32 %v289, %v369
          %v386 = vmul.f32 %v290, %v370
          %v387 = vmul.f32 %v291, %v371
          %v388 = vmul.f32 %v292, %v372
          %v389 = vmul.f32 %v293, %v373
          %v390 = vmul.f32 %v294, %v374
          %v391 = vmul.f32 %v295, %v375
          %v392 = vmul.f32 %v296, %v376
          %v393 = vmul.f32 %v297, %v377
          %v394 = vmul.f32 %v298, %v378
          %v395 = vmul.f32 %v299, %v379
          %v396 = vmul.f32 %v300, %v380
          %v397 = vmul.f32 %v301, %v381
          %v398 = vmul.f32 %v302, %v382
          %v399 = vmul.f32 %v303, %v383
          %v400 = vmul.f32 %v304, %v384
          %v401 = vpack.c.bf16 %v386, %v385
          %v402 = vpack.c.bf16 %v388, %v387
          %v403 = vpack.c.bf16 %v390, %v389
          %v404 = vpack.c.bf16 %v392, %v391
          %v405 = vpack.c.bf16 %v394, %v393
          %v406 = vpack.c.bf16 %v396, %v395
          %v407 = vpack.c.bf16 %v398, %v397
          %v408 = vpack.c.bf16 %v400, %v399
          %v417 = vunpack.c.l.b16 %v401
          %v418 = vunpack.c.h.b16 %v401
          %v419 = vunpack.c.l.b16 %v402
          %v420 = vunpack.c.h.b16 %v402
          %v421 = vunpack.c.l.b16 %v403
          %v422 = vunpack.c.h.b16 %v403
          %v423 = vunpack.c.l.b16 %v404
          %v424 = vunpack.c.h.b16 %v404
          %v425 = vunpack.c.l.b16 %v405
          %v426 = vunpack.c.h.b16 %v405
          %v427 = vunpack.c.l.b16 %v406
          %v428 = vunpack.c.h.b16 %v406
          %v429 = vunpack.c.l.b16 %v407
          %v430 = vunpack.c.h.b16 %v407
          %v431 = vunpack.c.l.b16 %v408
          %v432 = vunpack.c.h.b16 %v408
          %v433 = vpack.c.b16 %v417, %v417
          %v434 = vpack.c.b16 %v418, %v418
          %v435 = vpack.c.b16 %v419, %v419
          %v436 = vpack.c.b16 %v420, %v420
          %v437 = vpack.c.b16 %v421, %v421
          %v438 = vpack.c.b16 %v422, %v422
          %v439 = vpack.c.b16 %v423, %v423
          %v440 = vpack.c.b16 %v424, %v424
          %v441 = vpack.c.b16 %v425, %v425
          %v442 = vpack.c.b16 %v426, %v426
          %v443 = vpack.c.b16 %v427, %v427
          %v444 = vpack.c.b16 %v428, %v428
          %v445 = vpack.c.b16 %v429, %v429
          %v446 = vpack.c.b16 %v430, %v430
          %v447 = vpack.c.b16 %v431, %v431
          %v448 = vpack.c.b16 %v432, %v432
          %465 = vst [vmem:[#allocation2] sm:$0xf] %v433
          %466 = vst [vmem:[#allocation2 + $0x4] sm:$0xf] %v434
          %467 = vst [vmem:[#allocation2 + $0x8] sm:$0xf] %v435
          %468 = vst [vmem:[#allocation2 + $0xc] sm:$0xf] %v436
          %469 = vst [vmem:[#allocation2 + $0x10] sm:$0xf] %v437
          %470 = vst [vmem:[#allocation2 + $0x14] sm:$0xf] %v438
          %471 = vst [vmem:[#allocation2 + $0x18] sm:$0xf] %v439
          %472 = vst [vmem:[#allocation2 + $0x1c] sm:$0xf] %v440
          %473 = vst [vmem:[#allocation2 + $0x20] sm:$0xf] %v441
          %474 = vst [vmem:[#allocation2 + $0x24] sm:$0xf] %v442
          %475 = vst [vmem:[#allocation2 + $0x28] sm:$0xf] %v443
          %476 = vst [vmem:[#allocation2 + $0x2c] sm:$0xf] %v444
          %477 = vst [vmem:[#allocation2 + $0x30] sm:$0xf] %v445
          %478 = vst [vmem:[#allocation2 + $0x34] sm:$0xf] %v446
          %479 = vst [vmem:[#allocation2 + $0x38] sm:$0xf] %v447
          %480 = vst [vmem:[#allocation2 + $0x3c] sm:$0xf] %v448
          %481 = vst [vmem:[#allocation3] sm:$0x1] -inf
          %482 = vst [vmem:[#allocation4] sm:$0x1] 0.0
          %483 = vst [vmem:[#allocation5] sm:$0x1] 0.0
        $region48: #{tpu_custom_call.1} parent=35 // pred_fallthru
          _
        %v484 = vld [vmem:[%s247] sm:$0xf]
        %v485 = vld [vmem:[%s247 + $0x4] sm:$0xf]
        %v486 = vld [vmem:[%s247 + $0x8] sm:$0xf]
        %v487 = vld [vmem:[%s247 + $0xc] sm:$0xf]
        %v488 = vld [vmem:[%s247 + $0x10] sm:$0xf]
        %v489 = vld [vmem:[%s247 + $0x14] sm:$0xf]
        %v490 = vld [vmem:[%s247 + $0x18] sm:$0xf]
        %v491 = vld [vmem:[%s247 + $0x1c] sm:$0xf]
        %v492 = vld [vmem:[%s247 + $0x20] sm:$0xf]
        %v493 = vld [vmem:[%s247 + $0x24] sm:$0xf]
        %v494 = vld [vmem:[%s247 + $0x28] sm:$0xf]
        %v495 = vld [vmem:[%s247 + $0x2c] sm:$0xf]
        %v496 = vld [vmem:[%s247 + $0x30] sm:$0xf]
        %v497 = vld [vmem:[%s247 + $0x34] sm:$0xf]
        %v498 = vld [vmem:[%s247 + $0x38] sm:$0xf]
        %v499 = vld [vmem:[%s247 + $0x3c] sm:$0xf]
        %v500 = vld [vmem:[%s247 + $0x40] sm:$0xf]
        %v501 = vld [vmem:[%s247 + $0x44] sm:$0xf]
        %v502 = vld [vmem:[%s247 + $0x48] sm:$0xf]
        %v503 = vld [vmem:[%s247 + $0x4c] sm:$0xf]
        %v504 = vld [vmem:[%s247 + $0x50] sm:$0xf]
        %v505 = vld [vmem:[%s247 + $0x54] sm:$0xf]
        %v506 = vld [vmem:[%s247 + $0x58] sm:$0xf]
        %v507 = vld [vmem:[%s247 + $0x5c] sm:$0xf]
        %v508 = vld [vmem:[%s247 + $0x60] sm:$0xf]
        %v509 = vld [vmem:[%s247 + $0x64] sm:$0xf]
        %v510 = vld [vmem:[%s247 + $0x68] sm:$0xf]
        %v511 = vld [vmem:[%s247 + $0x6c] sm:$0xf]
        %v512 = vld [vmem:[%s247 + $0x70] sm:$0xf]
        %v513 = vld [vmem:[%s247 + $0x74] sm:$0xf]
        %v514 = vld [vmem:[%s247 + $0x78] sm:$0xf]
        %v515 = vld [vmem:[%s247 + $0x7c] sm:$0xf]
        %v516 = vld [vmem:[#allocation2] sm:$0xf]
        %v517 = vld [vmem:[#allocation2 + $0x4] sm:$0xf]
        %v518 = vld [vmem:[#allocation2 + $0x8] sm:$0xf]
        %v519 = vld [vmem:[#allocation2 + $0xc] sm:$0xf]
        %v520 = vld [vmem:[#allocation2 + $0x10] sm:$0xf]
        %v521 = vld [vmem:[#allocation2 + $0x14] sm:$0xf]
        %v522 = vld [vmem:[#allocation2 + $0x18] sm:$0xf]
        %v523 = vld [vmem:[#allocation2 + $0x1c] sm:$0xf]
        %v524 = vld [vmem:[#allocation2 + $0x20] sm:$0xf]
        %v525 = vld [vmem:[#allocation2 + $0x24] sm:$0xf]
        %v526 = vld [vmem:[#allocation2 + $0x28] sm:$0xf]
        %v527 = vld [vmem:[#allocation2 + $0x2c] sm:$0xf]
        %v528 = vld [vmem:[#allocation2 + $0x30] sm:$0xf]
        %v529 = vld [vmem:[#allocation2 + $0x34] sm:$0xf]
        %v530 = vld [vmem:[#allocation2 + $0x38] sm:$0xf]
        %v531 = vld [vmem:[#allocation2 + $0x3c] sm:$0xf]
        %v564 = vunpack.c.l.b16 %v484
        %v565 = vunpack.c.l.b16 %v485
        %v566 = vunpack.c.l.b16 %v486
        %v567 = vunpack.c.l.b16 %v487
        %v568 = vunpack.c.l.b16 %v488
        %v569 = vunpack.c.l.b16 %v489
        %v570 = vunpack.c.l.b16 %v490
        %v571 = vunpack.c.l.b16 %v491
        %v572 = vunpack.c.l.b16 %v492
        %v573 = vunpack.c.l.b16 %v493
        %v574 = vunpack.c.l.b16 %v494
        %v575 = vunpack.c.l.b16 %v495
        %v576 = vunpack.c.l.b16 %v496
        %v577 = vunpack.c.l.b16 %v497
        %v578 = vunpack.c.l.b16 %v498
        %v579 = vunpack.c.l.b16 %v499
        %v580 = vunpack.c.l.b16 %v500
        %v581 = vunpack.c.l.b16 %v501
        %v582 = vunpack.c.l.b16 %v502
        %v583 = vunpack.c.l.b16 %v503
        %v584 = vunpack.c.l.b16 %v504
        %v585 = vunpack.c.l.b16 %v505
        %v586 = vunpack.c.l.b16 %v506
        %v587 = vunpack.c.l.b16 %v507
        %v588 = vunpack.c.l.b16 %v508
        %v589 = vunpack.c.l.b16 %v509
        %v590 = vunpack.c.l.b16 %v510
        %v591 = vunpack.c.l.b16 %v511
        %v592 = vunpack.c.l.b16 %v512
        %v593 = vunpack.c.l.b16 %v513
        %v594 = vunpack.c.l.b16 %v514
        %v595 = vunpack.c.l.b16 %v515
        %v596 = vpack.c.b16 %v565, %v564
        %v597 = vpack.c.b16 %v567, %v566
        %v598 = vpack.c.b16 %v569, %v568
        %v599 = vpack.c.b16 %v571, %v570
        %v600 = vpack.c.b16 %v573, %v572
        %v601 = vpack.c.b16 %v575, %v574
        %v602 = vpack.c.b16 %v577, %v576
        %v603 = vpack.c.b16 %v579, %v578
        %v604 = vpack.c.b16 %v581, %v580
        %v605 = vpack.c.b16 %v583, %v582
        %v606 = vpack.c.b16 %v585, %v584
        %v607 = vpack.c.b16 %v587, %v586
        %v608 = vpack.c.b16 %v589, %v588
        %v609 = vpack.c.b16 %v591, %v590
        %v610 = vpack.c.b16 %v593, %v592
        %v611 = vpack.c.b16 %v595, %v594
        %v644 = vunpack.c.l.b16 %v516
        %v645 = vunpack.c.l.b16 %v517
        %v646 = vunpack.c.l.b16 %v518
        %v647 = vunpack.c.l.b16 %v519
        %v648 = vunpack.c.l.b16 %v520
        %v649 = vunpack.c.l.b16 %v521
        %v650 = vunpack.c.l.b16 %v522
        %v651 = vunpack.c.l.b16 %v523
        %v652 = vunpack.c.l.b16 %v524
        %v653 = vunpack.c.l.b16 %v525
        %v654 = vunpack.c.l.b16 %v526
        %v655 = vunpack.c.l.b16 %v527
        %v656 = vunpack.c.l.b16 %v528
        %v657 = vunpack.c.l.b16 %v529
        %v658 = vunpack.c.l.b16 %v530
        %v659 = vunpack.c.l.b16 %v531
        %v660 = vpack.c.b16 %v645, %v644
        %v661 = vpack.c.b16 %v647, %v646
        %v662 = vpack.c.b16 %v649, %v648
        %v663 = vpack.c.b16 %v651, %v650
        %v664 = vpack.c.b16 %v653, %v652
        %v665 = vpack.c.b16 %v655, %v654
        %v666 = vpack.c.b16 %v657, %v656
        %v667 = vpack.c.b16 %v659, %v658
        %676 = vmatprep.subr.bf16.mxu0 0
        %677 = vmatpush1.bf16.xpose.msra.mxu0 %v667
        %678 = vmatprep.subr.bf16.mxu0 0
        %679 = vmatpush1.bf16.xpose.msra.mxu0 %v666
        %680 = vmatprep.subr.bf16.mxu0 0
        %681 = vmatpush1.bf16.xpose.msra.mxu0 %v665
        %682 = vmatprep.subr.bf16.mxu0 0
        %683 = vmatpush1.bf16.xpose.msra.mxu0 %v664
        %684 = vmatprep.subr.bf16.mxu0 0
        %685 = vmatpush1.bf16.xpose.msra.mxu0 %v663
        %686 = vmatprep.subr.bf16.mxu0 0
        %687 = vmatpush1.bf16.xpose.msra.mxu0 %v662
        %688 = vmatprep.subr.bf16.mxu0 0
        %689 = vmatpush1.bf16.xpose.msra.mxu0 %v661
        %690 = vmatprep.subr.bf16.mxu0 0
        %691 = vmatpush1.bf16.xpose.msra.mxu0 %v660
        %692 = vmatprep.subr.bf16.mxu0 0
        %693 = vmatpush2.bf16.xpose.msra.mxu0 0
        %694 = vmatprep.subr.bf16.mxu0 0
        %695 = vmatpush2.bf16.xpose.msra.mxu0 0
        %696 = vmatprep.subr.bf16.mxu0 0
        %697 = vmatpush2.bf16.xpose.msra.mxu0 0
        %698 = vmatprep.subr.bf16.mxu0 0
        %699 = vmatpush2.bf16.xpose.msra.mxu0 0
        %700 = vmatprep.subr.bf16.mxu0 0
        %701 = vmatpush2.bf16.xpose.msra.mxu0 0
        %702 = vmatprep.subr.bf16.mxu0 0
        %703 = vmatpush2.bf16.xpose.msra.mxu0 0
        %704 = vmatprep.subr.bf16.mxu0 0
        %705 = vmatpush2.bf16.xpose.msra.mxu0 0
        %706 = vmatprep.subr.bf16.mxu0 0
        %707 = vmatpush2.bf16.xpose.msra.mxu0 0
        %708 = vmatprep.mubr.bf16.mxu0 0
        %709 = vmatmul.mubr.bf16.gmra.mxu0 %v596
        %v710 = vpop.f32.mrf.mxu0
        %v711 = vadd.f32 0.0, %v710
        %v712 = vpop.f32.mrf.mxu0
        %v713 = vpop.f32.mrf.mxu0
        %v714 = vadd.f32 0.0, %v713
        %v715 = vpop.f32.mrf.mxu0
        %716 = vmatprep.mubr.bf16.mxu0 0
        %717 = vmatmul.mubr.bf16.gmra.mxu0 %v597
        %v718 = vpop.f32.mrf.mxu0
        %v719 = vadd.f32 0.0, %v718
        %v720 = vpop.f32.mrf.mxu0
        %v721 = vpop.f32.mrf.mxu0
        %v722 = vadd.f32 0.0, %v721
        %v723 = vpop.f32.mrf.mxu0
        %724 = vmatprep.mubr.bf16.mxu0 0
        %725 = vmatmul.mubr.bf16.gmra.mxu0 %v598
        %v726 = vpop.f32.mrf.mxu0
        %v727 = vadd.f32 0.0, %v726
        %v728 = vpop.f32.mrf.mxu0
        %v729 = vpop.f32.mrf.mxu0
        %v730 = vadd.f32 0.0, %v729
        %v731 = vpop.f32.mrf.mxu0
        %732 = vmatprep.mubr.bf16.mxu0 0
        %733 = vmatmul.mubr.bf16.gmra.mxu0 %v599
        %v734 = vpop.f32.mrf.mxu0
        %v735 = vadd.f32 0.0, %v734
        %v736 = vpop.f32.mrf.mxu0
        %v737 = vpop.f32.mrf.mxu0
        %v738 = vadd.f32 0.0, %v737
        %v739 = vpop.f32.mrf.mxu0
        %740 = vmatprep.mubr.bf16.mxu0 0
        %741 = vmatmul.mubr.bf16.gmra.mxu0 %v600
        %v742 = vpop.f32.mrf.mxu0
        %v743 = vadd.f32 0.0, %v742
        %v744 = vpop.f32.mrf.mxu0
        %v745 = vpop.f32.mrf.mxu0
        %v746 = vadd.f32 0.0, %v745
        %v747 = vpop.f32.mrf.mxu0
        %748 = vmatprep.mubr.bf16.mxu0 0
        %749 = vmatmul.mubr.bf16.gmra.mxu0 %v601
        %v750 = vpop.f32.mrf.mxu0
        %v751 = vadd.f32 0.0, %v750
        %v752 = vpop.f32.mrf.mxu0
        %v753 = vpop.f32.mrf.mxu0
        %v754 = vadd.f32 0.0, %v753
        %v755 = vpop.f32.mrf.mxu0
        %756 = vmatprep.mubr.bf16.mxu0 0
        %757 = vmatmul.mubr.bf16.gmra.mxu0 %v602
        %v758 = vpop.f32.mrf.mxu0
        %v759 = vadd.f32 0.0, %v758
        %v760 = vpop.f32.mrf.mxu0
        %v761 = vpop.f32.mrf.mxu0
        %v762 = vadd.f32 0.0, %v761
        %v763 = vpop.f32.mrf.mxu0
        %764 = vmatprep.mubr.bf16.mxu0 0
        %765 = vmatmul.mubr.bf16.gmra.mxu0 %v603
        %v766 = vpop.f32.mrf.mxu0
        %v767 = vadd.f32 0.0, %v766
        %v768 = vpop.f32.mrf.mxu0
        %v769 = vpop.f32.mrf.mxu0
        %v770 = vadd.f32 0.0, %v769
        %v771 = vpop.f32.mrf.mxu0
        %772 = vmatprep.mubr.bf16.mxu0 0
        %773 = vmatmul.mubr.bf16.gmra.mxu0 %v604
        %v774 = vpop.f32.mrf.mxu0
        %v775 = vadd.f32 0.0, %v774
        %v776 = vpop.f32.mrf.mxu0
        %v777 = vpop.f32.mrf.mxu0
        %v778 = vadd.f32 0.0, %v777
        %v779 = vpop.f32.mrf.mxu0
        %780 = vmatprep.mubr.bf16.mxu0 0
        %781 = vmatmul.mubr.bf16.gmra.mxu0 %v605
        %v782 = vpop.f32.mrf.mxu0
        %v783 = vadd.f32 0.0, %v782
        %v784 = vpop.f32.mrf.mxu0
        %v785 = vpop.f32.mrf.mxu0
        %v786 = vadd.f32 0.0, %v785
        %v787 = vpop.f32.mrf.mxu0
        %788 = vmatprep.mubr.bf16.mxu0 0
        %789 = vmatmul.mubr.bf16.gmra.mxu0 %v606
        %v790 = vpop.f32.mrf.mxu0
        %v791 = vadd.f32 0.0, %v790
        %v792 = vpop.f32.mrf.mxu0
        %v793 = vpop.f32.mrf.mxu0
        %v794 = vadd.f32 0.0, %v793
        %v795 = vpop.f32.mrf.mxu0
        %796 = vmatprep.mubr.bf16.mxu0 0
        %797 = vmatmul.mubr.bf16.gmra.mxu0 %v607
        %v798 = vpop.f32.mrf.mxu0
        %v799 = vadd.f32 0.0, %v798
        %v800 = vpop.f32.mrf.mxu0
        %v801 = vpop.f32.mrf.mxu0
        %v802 = vadd.f32 0.0, %v801
        %v803 = vpop.f32.mrf.mxu0
        %804 = vmatprep.mubr.bf16.mxu0 0
        %805 = vmatmul.mubr.bf16.gmra.mxu0 %v608
        %v806 = vpop.f32.mrf.mxu0
        %v807 = vadd.f32 0.0, %v806
        %v808 = vpop.f32.mrf.mxu0
        %v809 = vpop.f32.mrf.mxu0
        %v810 = vadd.f32 0.0, %v809
        %v811 = vpop.f32.mrf.mxu0
        %812 = vmatprep.mubr.bf16.mxu0 0
        %813 = vmatmul.mubr.bf16.gmra.mxu0 %v609
        %v814 = vpop.f32.mrf.mxu0
        %v815 = vadd.f32 0.0, %v814
        %v816 = vpop.f32.mrf.mxu0
        %v817 = vpop.f32.mrf.mxu0
        %v818 = vadd.f32 0.0, %v817
        %v819 = vpop.f32.mrf.mxu0
        %820 = vmatprep.mubr.bf16.mxu0 0
        %821 = vmatmul.mubr.bf16.gmra.mxu0 %v610
        %v822 = vpop.f32.mrf.mxu0
        %v823 = vadd.f32 0.0, %v822
        %v824 = vpop.f32.mrf.mxu0
        %v825 = vpop.f32.mrf.mxu0
        %v826 = vadd.f32 0.0, %v825
        %v827 = vpop.f32.mrf.mxu0
        %828 = vmatprep.mubr.bf16.mxu0 0
        %829 = vmatmul.mubr.bf16.gmra.mxu0 %v611
        %v830 = vpop.f32.mrf.mxu0
        %v831 = vadd.f32 0.0, %v830
        %v832 = vpop.f32.mrf.mxu0
        %v833 = vpop.f32.mrf.mxu0
        %v834 = vadd.f32 0.0, %v833
        %v835 = vpop.f32.mrf.mxu0
        %836 = vdwg.mxu0
        %s837 = sld [smem:[#allocation6]]
        %v838 = vld [vmem:[%s281] sm:$0x1]
        %s839 = smul.u32 %s30, 256
        %v840 = vlaneseq
        %v841 = vshrl.u32 %v840, 7
        %v842 = vadd.s32 %v841, 8
        %v843 = vadd.s32 %v841, 16
        %v844 = vadd.s32 %v841, 24
        %v845 = vadd.s32 %v841, 32
        %v846 = vadd.s32 %v841, 40
        %v847 = vadd.s32 %v841, 48
        %v848 = vadd.s32 %v841, 56
        %v849 = vadd.s32 %v841, 64
        %v850 = vadd.s32 %v841, 72
        %v851 = vadd.s32 %v841, 80
        %v852 = vadd.s32 %v841, 88
        %v853 = vadd.s32 %v841, 96
        %v854 = vadd.s32 %v841, 104
        %v855 = vadd.s32 %v841, 112
        %v856 = vadd.s32 %v841, 120
        %v857 = vadd.s32 %v841, 128
        %v858 = vadd.s32 %v841, 136
        %v859 = vadd.s32 %v841, 144
        %v860 = vadd.s32 %v841, 152
        %v861 = vadd.s32 %v841, 160
        %v862 = vadd.s32 %v841, 168
        %v863 = vadd.s32 %v841, 176
        %v864 = vadd.s32 %v841, 184
        %v865 = vadd.s32 %v841, 192
        %v866 = vadd.s32 %v841, 200
        %v867 = vadd.s32 %v841, 208
        %v868 = vadd.s32 %v841, 216
        %v869 = vadd.s32 %v841, 224
        %v870 = vadd.s32 %v841, 232
        %v871 = vadd.s32 %v841, 240
        %v872 = vadd.s32 %v841, 248
        %v873 = vstv %s839
        %v874 = vadd.s32 %v873, %v841
        %v875 = vadd.s32 %v873, %v842
        %v876 = vadd.s32 %v873, %v843
        %v877 = vadd.s32 %v873, %v844
        %v878 = vadd.s32 %v873, %v845
        %v879 = vadd.s32 %v873, %v846
        %v880 = vadd.s32 %v873, %v847
        %v881 = vadd.s32 %v873, %v848
        %v882 = vadd.s32 %v873, %v849
        %v883 = vadd.s32 %v873, %v850
        %v884 = vadd.s32 %v873, %v851
        %v885 = vadd.s32 %v873, %v852
        %v886 = vadd.s32 %v873, %v853
        %v887 = vadd.s32 %v873, %v854
        %v888 = vadd.s32 %v873, %v855
        %v889 = vadd.s32 %v873, %v856
        %v890 = vadd.s32 %v873, %v857
        %v891 = vadd.s32 %v873, %v858
        %v892 = vadd.s32 %v873, %v859
        %v893 = vadd.s32 %v873, %v860
        %v894 = vadd.s32 %v873, %v861
        %v895 = vadd.s32 %v873, %v862
        %v896 = vadd.s32 %v873, %v863
        %v897 = vadd.s32 %v873, %v864
        %v898 = vadd.s32 %v873, %v865
        %v899 = vadd.s32 %v873, %v866
        %v900 = vadd.s32 %v873, %v867
        %v901 = vadd.s32 %v873, %v868
        %v902 = vadd.s32 %v873, %v869
        %v903 = vadd.s32 %v873, %v870
        %v904 = vadd.s32 %v873, %v871
        %v905 = vadd.s32 %v873, %v872
        %v906 = vlaneseq
        %v907 = vshrl.u32 %v906, 7
        %v908 = vsub.s32 0, %v907
        %v909 = vrot.slane %v838, %v908
        %vm910 = vcmp.eq.s32.totalorder %v874, %v909
        %vm911 = vcmp.eq.s32.totalorder %v875, %v909
        %vm912 = vcmp.eq.s32.totalorder %v876, %v909
        %vm913 = vcmp.eq.s32.totalorder %v877, %v909
        %vm914 = vcmp.eq.s32.totalorder %v878, %v909
        %vm915 = vcmp.eq.s32.totalorder %v879, %v909
        %vm916 = vcmp.eq.s32.totalorder %v880, %v909
        %vm917 = vcmp.eq.s32.totalorder %v881, %v909
        %vm918 = vcmp.eq.s32.totalorder %v882, %v909
        %vm919 = vcmp.eq.s32.totalorder %v883, %v909
        %vm920 = vcmp.eq.s32.totalorder %v884, %v909
        %vm921 = vcmp.eq.s32.totalorder %v885, %v909
        %vm922 = vcmp.eq.s32.totalorder %v886, %v909
        %vm923 = vcmp.eq.s32.totalorder %v887, %v909
        %vm924 = vcmp.eq.s32.totalorder %v888, %v909
        %vm925 = vcmp.eq.s32.totalorder %v889, %v909
        %vm926 = vcmp.eq.s32.totalorder %v890, %v909
        %vm927 = vcmp.eq.s32.totalorder %v891, %v909
        %vm928 = vcmp.eq.s32.totalorder %v892, %v909
        %vm929 = vcmp.eq.s32.totalorder %v893, %v909
        %vm930 = vcmp.eq.s32.totalorder %v894, %v909
        %vm931 = vcmp.eq.s32.totalorder %v895, %v909
        %vm932 = vcmp.eq.s32.totalorder %v896, %v909
        %vm933 = vcmp.eq.s32.totalorder %v897, %v909
        %vm934 = vcmp.eq.s32.totalorder %v898, %v909
        %vm935 = vcmp.eq.s32.totalorder %v899, %v909
        %vm936 = vcmp.eq.s32.totalorder %v900, %v909
        %vm937 = vcmp.eq.s32.totalorder %v901, %v909
        %vm938 = vcmp.eq.s32.totalorder %v902, %v909
        %vm939 = vcmp.eq.s32.totalorder %v903, %v909
        %vm940 = vcmp.eq.s32.totalorder %v904, %v909
        %vm941 = vcmp.eq.s32.totalorder %v905, %v909
        %s942 = smul.f32 %s837, 0.35
        %v943 = vstv %s942
        %v944 = vsub.f32 %v711, %v943
        %v945 = vsub.f32 %v714, %v943
        %v946 = vsub.f32 %v719, %v943
        %v947 = vsub.f32 %v722, %v943
        %v948 = vsub.f32 %v727, %v943
        %v949 = vsub.f32 %v730, %v943
        %v950 = vsub.f32 %v735, %v943
        %v951 = vsub.f32 %v738, %v943
        %v952 = vsub.f32 %v743, %v943
        %v953 = vsub.f32 %v746, %v943
        %v954 = vsub.f32 %v751, %v943
        %v955 = vsub.f32 %v754, %v943
        %v956 = vsub.f32 %v759, %v943
        %v957 = vsub.f32 %v762, %v943
        %v958 = vsub.f32 %v767, %v943
        %v959 = vsub.f32 %v770, %v943
        %v960 = vsub.f32 %v775, %v943
        %v961 = vsub.f32 %v778, %v943
        %v962 = vsub.f32 %v783, %v943
        %v963 = vsub.f32 %v786, %v943
        %v964 = vsub.f32 %v791, %v943
        %v965 = vsub.f32 %v794, %v943
        %v966 = vsub.f32 %v799, %v943
        %v967 = vsub.f32 %v802, %v943
        %v968 = vsub.f32 %v807, %v943
        %v969 = vsub.f32 %v810, %v943
        %v970 = vsub.f32 %v815, %v943
        %v971 = vsub.f32 %v818, %v943
        %v972 = vsub.f32 %v823, %v943
        %v973 = vsub.f32 %v826, %v943
        %v974 = vsub.f32 %v831, %v943
        %v975 = vsub.f32 %v834, %v943
        %v976 = vsel %vm910, %v944, %v711
        %v977 = vsel %vm911, %v945, %v714
        %v978 = vsel %vm912, %v946, %v719
        %v979 = vsel %vm913, %v947, %v722
        %v980 = vsel %vm914, %v948, %v727
        %v981 = vsel %vm915, %v949, %v730
        %v982 = vsel %vm916, %v950, %v735
        %v983 = vsel %vm917, %v951, %v738
        %v984 = vsel %vm918, %v952, %v743
        %v985 = vsel %vm919, %v953, %v746
        %v986 = vsel %vm920, %v954, %v751
        %v987 = vsel %vm921, %v955, %v754
        %v988 = vsel %vm922, %v956, %v759
        %v989 = vsel %vm923, %v957, %v762
        %v990 = vsel %vm924, %v958, %v767
        %v991 = vsel %vm925, %v959, %v770
        %v992 = vsel %vm926, %v960, %v775
        %v993 = vsel %vm927, %v961, %v778
        %v994 = vsel %vm928, %v962, %v783
        %v995 = vsel %vm929, %v963, %v786
        %v996 = vsel %vm930, %v964, %v791
        %v997 = vsel %vm931, %v965, %v794
        %v998 = vsel %vm932, %v966, %v799
        %v999 = vsel %vm933, %v967, %v802
        %v1000 = vsel %vm934, %v968, %v807
        %v1001 = vsel %vm935, %v969, %v810
        %v1002 = vsel %vm936, %v970, %v815
        %v1003 = vsel %vm937, %v971, %v818
        %v1004 = vsel %vm938, %v972, %v823
        %v1005 = vsel %vm939, %v973, %v826
        %v1006 = vsel %vm940, %v974, %v831
        %v1007 = vsel %vm941, %v975, %v834
        %v1008 = vmul.f32 %v976, 64.0
        %v1009 = vmul.f32 %v977, 64.0
        %v1010 = vmul.f32 %v978, 64.0
        %v1011 = vmul.f32 %v979, 64.0
        %v1012 = vmul.f32 %v980, 64.0
        %v1013 = vmul.f32 %v981, 64.0
        %v1014 = vmul.f32 %v982, 64.0
        %v1015 = vmul.f32 %v983, 64.0
        %v1016 = vmul.f32 %v984, 64.0
        %v1017 = vmul.f32 %v985, 64.0
        %v1018 = vmul.f32 %v986, 64.0
        %v1019 = vmul.f32 %v987, 64.0
        %v1020 = vmul.f32 %v988, 64.0
        %v1021 = vmul.f32 %v989, 64.0
        %v1022 = vmul.f32 %v990, 64.0
        %v1023 = vmul.f32 %v991, 64.0
        %v1024 = vmul.f32 %v992, 64.0
        %v1025 = vmul.f32 %v993, 64.0
        %v1026 = vmul.f32 %v994, 64.0
        %v1027 = vmul.f32 %v995, 64.0
        %v1028 = vmul.f32 %v996, 64.0
        %v1029 = vmul.f32 %v997, 64.0
        %v1030 = vmul.f32 %v998, 64.0
        %v1031 = vmul.f32 %v999, 64.0
        %v1032 = vmul.f32 %v1000, 64.0
        %v1033 = vmul.f32 %v1001, 64.0
        %v1034 = vmul.f32 %v1002, 64.0
        %v1035 = vmul.f32 %v1003, 64.0
        %v1036 = vmul.f32 %v1004, 64.0
        %v1037 = vmul.f32 %v1005, 64.0
        %v1038 = vmul.f32 %v1006, 64.0
        %v1039 = vmul.f32 %v1007, 64.0
        %v1040 = vld [vmem:[#allocation3] sm:$0x1]
        %v1041 = vmax.f32 %v1008, %v1012
        %v1042 = vmax.f32 %v1009, %v1013
        %v1043 = vmax.f32 %v1010, %v1014
        %v1044 = vmax.f32 %v1011, %v1015
        %v1045 = vmax.f32 %v1041, %v1016
        %v1046 = vmax.f32 %v1042, %v1017
        %v1047 = vmax.f32 %v1043, %v1018
        %v1048 = vmax.f32 %v1044, %v1019
        %v1049 = vmax.f32 %v1045, %v1020
        %v1050 = vmax.f32 %v1046, %v1021
        %v1051 = vmax.f32 %v1047, %v1022
        %v1052 = vmax.f32 %v1048, %v1023
        %v1053 = vmax.f32 %v1049, %v1024
        %v1054 = vmax.f32 %v1050, %v1025
        %v1055 = vmax.f32 %v1051, %v1026
        %v1056 = vmax.f32 %v1052, %v1027
        %v1057 = vmax.f32 %v1053, %v1028
        %v1058 = vmax.f32 %v1054, %v1029
        %v1059 = vmax.f32 %v1055, %v1030
        %v1060 = vmax.f32 %v1056, %v1031
        %v1061 = vmax.f32 %v1057, %v1032
        %v1062 = vmax.f32 %v1058, %v1033
        %v1063 = vmax.f32 %v1059, %v1034
        %v1064 = vmax.f32 %v1060, %v1035
        %v1065 = vmax.f32 %v1061, %v1036
        %v1066 = vmax.f32 %v1062, %v1037
        %v1067 = vmax.f32 %v1063, %v1038
        %v1068 = vmax.f32 %v1064, %v1039
        %v1069 = vmax.f32 %v1065, %v1066
        %v1070 = vmax.f32 %v1067, %v1068
        %v1071 = vmax.f32 %v1069, %v1070
        %v1072 = vrot.slane %v1071, 4
        %v1073 = vmax.f32 %v1071, %v1072
        %v1074 = vrot.slane %v1073, 2
        %v1075 = vmax.f32 %v1073, %v1074
        %v1076 = vrot.slane %v1075, 1
        %v1077 = vmax.f32 %v1075, %v1076
        %v1078 = vmax.f32 %v1040, %v1077
        %v1080 = vlaneseq
        %v1081 = vshrl.u32 %v1080, 7
        %v1082 = vsub.s32 0, %v1081
        %v1083 = vrot.slane %v1078, %v1082
        %v1085 = vsub.f32 %v1008, %v1083
        %v1086 = vsub.f32 %v1009, %v1083
        %v1087 = vsub.f32 %v1010, %v1083
        %v1088 = vsub.f32 %v1011, %v1083
        %v1089 = vsub.f32 %v1012, %v1083
        %v1090 = vsub.f32 %v1013, %v1083
        %v1091 = vsub.f32 %v1014, %v1083
        %v1092 = vsub.f32 %v1015, %v1083
        %v1093 = vsub.f32 %v1016, %v1083
        %v1094 = vsub.f32 %v1017, %v1083
        %v1095 = vsub.f32 %v1018, %v1083
        %v1096 = vsub.f32 %v1019, %v1083
        %v1097 = vsub.f32 %v1020, %v1083
        %v1098 = vsub.f32 %v1021, %v1083
        %v1099 = vsub.f32 %v1022, %v1083
        %v1100 = vsub.f32 %v1023, %v1083
        %v1101 = vsub.f32 %v1024, %v1083
        %v1102 = vsub.f32 %v1025, %v1083
        %v1103 = vsub.f32 %v1026, %v1083
        %v1104 = vsub.f32 %v1027, %v1083
        %v1105 = vsub.f32 %v1028, %v1083
        %v1106 = vsub.f32 %v1029, %v1083
        %v1107 = vsub.f32 %v1030, %v1083
        %v1108 = vsub.f32 %v1031, %v1083
        %v1109 = vsub.f32 %v1032, %v1083
        %v1110 = vsub.f32 %v1033, %v1083
        %v1111 = vsub.f32 %v1034, %v1083
        %v1112 = vsub.f32 %v1035, %v1083
        %v1113 = vsub.f32 %v1036, %v1083
        %v1114 = vsub.f32 %v1037, %v1083
        %v1115 = vsub.f32 %v1038, %v1083
        %v1116 = vsub.f32 %v1039, %v1083
        %v1117 = vmul.f32 %v1085, 1.442695
        %v1118 = vpow.pop %v1117
        %v1119 = vmul.f32 %v1086, 1.442695
        %v1120 = vpow.pop %v1119
        %v1121 = vmul.f32 %v1087, 1.442695
        %v1122 = vpow.pop %v1121
        %v1123 = vmul.f32 %v1088, 1.442695
        %v1124 = vpow.pop %v1123
        %v1125 = vmul.f32 %v1089, 1.442695
        %v1126 = vpow.pop %v1125
        %v1127 = vmul.f32 %v1090, 1.442695
        %v1128 = vpow.pop %v1127
        %v1129 = vmul.f32 %v1091, 1.442695
        %v1130 = vpow.pop %v1129
        %v1131 = vmul.f32 %v1092, 1.442695
        %v1132 = vpow.pop %v1131
        %v1133 = vmul.f32 %v1093, 1.442695
        %v1134 = vpow.pop %v1133
        %v1135 = vmul.f32 %v1094, 1.442695
        %v1136 = vpow.pop %v1135
        %v1137 = vmul.f32 %v1095, 1.442695
        %v1138 = vpow.pop %v1137
        %v1139 = vmul.f32 %v1096, 1.442695
        %v1140 = vpow.pop %v1139
        %v1141 = vmul.f32 %v1097, 1.442695
        %v1142 = vpow.pop %v1141
        %v1143 = vmul.f32 %v1098, 1.442695
        %v1144 = vpow.pop %v1143
        %v1145 = vmul.f32 %v1099, 1.442695
        %v1146 = vpow.pop %v1145
        %v1147 = vmul.f32 %v1100, 1.442695
        %v1148 = vpow.pop %v1147
        %v1149 = vmul.f32 %v1101, 1.442695
        %v1150 = vpow.pop %v1149
        %v1151 = vmul.f32 %v1102, 1.442695
        %v1152 = vpow.pop %v1151
        %v1153 = vmul.f32 %v1103, 1.442695
        %v1154 = vpow.pop %v1153
        %v1155 = vmul.f32 %v1104, 1.442695
        %v1156 = vpow.pop %v1155
        %v1157 = vmul.f32 %v1105, 1.442695
        %v1158 = vpow.pop %v1157
        %v1159 = vmul.f32 %v1106, 1.442695
        %v1160 = vpow.pop %v1159
        %v1161 = vmul.f32 %v1107, 1.442695
        %v1162 = vpow.pop %v1161
        %v1163 = vmul.f32 %v1108, 1.442695
        %v1164 = vpow.pop %v1163
        %v1165 = vmul.f32 %v1109, 1.442695
        %v1166 = vpow.pop %v1165
        %v1167 = vmul.f32 %v1110, 1.442695
        %v1168 = vpow.pop %v1167
        %v1169 = vmul.f32 %v1111, 1.442695
        %v1170 = vpow.pop %v1169
        %v1171 = vmul.f32 %v1112, 1.442695
        %v1172 = vpow.pop %v1171
        %v1173 = vmul.f32 %v1113, 1.442695
        %v1174 = vpow.pop %v1173
        %v1175 = vmul.f32 %v1114, 1.442695
        %v1176 = vpow.pop %v1175
        %v1177 = vmul.f32 %v1115, 1.442695
        %v1178 = vpow.pop %v1177
        %v1179 = vmul.f32 %v1116, 1.442695
        %v1180 = vpow.pop %v1179
        %v1181 = vsub.f32 %v1040, %v1078
        %v1182 = vmul.f32 %v1181, 1.442695
        %v1183 = vpow.pop %v1182
        %v1184 = vld [vmem:[#allocation4] sm:$0x1]
        %v1185 = vmul.f32 %v1183, %v1184
        %v1186 = vadd.f32 %v1118, %v1120
        %v1187 = vadd.f32 %v1186, %v1122
        %v1188 = vadd.f32 %v1187, %v1124
        %v1189 = vadd.f32 %v1188, %v1126
        %v1190 = vadd.f32 %v1189, %v1128
        %v1191 = vadd.f32 %v1190, %v1130
        %v1192 = vadd.f32 %v1191, %v1132
        %v1193 = vadd.f32 %v1192, %v1134
        %v1194 = vadd.f32 %v1193, %v1136
        %v1195 = vadd.f32 %v1194, %v1138
        %v1196 = vadd.f32 %v1195, %v1140
        %v1197 = vadd.f32 %v1196, %v1142
        %v1198 = vadd.f32 %v1197, %v1144
        %v1199 = vadd.f32 %v1198, %v1146
        %v1200 = vadd.f32 %v1199, %v1148
        %v1201 = vadd.f32 %v1200, %v1150
        %v1202 = vadd.f32 %v1201, %v1152
        %v1203 = vadd.f32 %v1202, %v1154
        %v1204 = vadd.f32 %v1203, %v1156
        %v1205 = vadd.f32 %v1204, %v1158
        %v1206 = vadd.f32 %v1205, %v1160
        %v1207 = vadd.f32 %v1206, %v1162
        %v1208 = vadd.f32 %v1207, %v1164
        %v1209 = vadd.f32 %v1208, %v1166
        %v1210 = vadd.f32 %v1209, %v1168
        %v1211 = vadd.f32 %v1210, %v1170
        %v1212 = vadd.f32 %v1211, %v1172
        %v1213 = vadd.f32 %v1212, %v1174
        %v1214 = vadd.f32 %v1213, %v1176
        %v1215 = vadd.f32 %v1214, %v1178
        %v1216 = vadd.f32 %v1215, %v1180
        %v1217 = vrot.slane %v1216, 4
        %v1218 = vadd.f32 %v1216, %v1217
        %v1219 = vrot.slane %v1218, 2
        %v1220 = vadd.f32 %v1218, %v1219
        %v1221 = vrot.slane %v1220, 1
        %v1222 = vadd.f32 %v1220, %v1221
        %v1223 = vadd.f32 %v1185, %v1222
        %1224 = vst [vmem:[#allocation4] sm:$0x1] %v1223
        %1225 = vst [vmem:[#allocation3] sm:$0x1] %v1078
        %v1226 = vld [vmem:[#allocation5] sm:$0x1]
        %v1227 = vsel %vm910, %v1008, 0.0
        %v1228 = vsel %vm911, %v1009, 0.0
        %v1229 = vsel %vm912, %v1010, 0.0
        %v1230 = vsel %vm913, %v1011, 0.0
        %v1231 = vsel %vm914, %v1012, 0.0
        %v1232 = vsel %vm915, %v1013, 0.0
        %v1233 = vsel %vm916, %v1014, 0.0
        %v1234 = vsel %vm917, %v1015, 0.0
        %v1235 = vsel %vm918, %v1016, 0.0
        %v1236 = vsel %vm919, %v1017, 0.0
        %v1237 = vsel %vm920, %v1018, 0.0
        %v1238 = vsel %vm921, %v1019, 0.0
        %v1239 = vsel %vm922, %v1020, 0.0
        %v1240 = vsel %vm923, %v1021, 0.0
        %v1241 = vsel %vm924, %v1022, 0.0
        %v1242 = vsel %vm925, %v1023, 0.0
        %v1243 = vsel %vm926, %v1024, 0.0
        %v1244 = vsel %vm927, %v1025, 0.0
        %v1245 = vsel %vm928, %v1026, 0.0
        %v1246 = vsel %vm929, %v1027, 0.0
        %v1247 = vsel %vm930, %v1028, 0.0
        %v1248 = vsel %vm931, %v1029, 0.0
        %v1249 = vsel %vm932, %v1030, 0.0
        %v1250 = vsel %vm933, %v1031, 0.0
        %v1251 = vsel %vm934, %v1032, 0.0
        %v1252 = vsel %vm935, %v1033, 0.0
        %v1253 = vsel %vm936, %v1034, 0.0
        %v1254 = vsel %vm937, %v1035, 0.0
        %v1255 = vsel %vm938, %v1036, 0.0
        %v1256 = vsel %vm939, %v1037, 0.0
        %v1257 = vsel %vm940, %v1038, 0.0
        %v1258 = vsel %vm941, %v1039, 0.0
        %v1259 = vadd.f32 %v1227, %v1228
        %v1260 = vadd.f32 %v1259, %v1229
        %v1261 = vadd.f32 %v1260, %v1230
        %v1262 = vadd.f32 %v1261, %v1231
        %v1263 = vadd.f32 %v1262, %v1232
        %v1264 = vadd.f32 %v1263, %v1233
        %v1265 = vadd.f32 %v1264, %v1234
        %v1266 = vadd.f32 %v1265, %v1235
        %v1267 = vadd.f32 %v1266, %v1236
        %v1268 = vadd.f32 %v1267, %v1237
        %v1269 = vadd.f32 %v1268, %v1238
        %v1270 = vadd.f32 %v1269, %v1239
        %v1271 = vadd.f32 %v1270, %v1240
        %v1272 = vadd.f32 %v1271, %v1241
        %v1273 = vadd.f32 %v1272, %v1242
        %v1274 = vadd.f32 %v1273, %v1243
        %v1275 = vadd.f32 %v1274, %v1244
        %v1276 = vadd.f32 %v1275, %v1245
        %v1277 = vadd.f32 %v1276, %v1246
        %v1278 = vadd.f32 %v1277, %v1247
        %v1279 = vadd.f32 %v1278, %v1248
        %v1280 = vadd.f32 %v1279, %v1249
        %v1281 = vadd.f32 %v1280, %v1250
        %v1282 = vadd.f32 %v1281, %v1251
        %v1283 = vadd.f32 %v1282, %v1252
        %v1284 = vadd.f32 %v1283, %v1253
        %v1285 = vadd.f32 %v1284, %v1254
        %v1286 = vadd.f32 %v1285, %v1255
        %v1287 = vadd.f32 %v1286, %v1256
        %v1288 = vadd.f32 %v1287, %v1257
        %v1289 = vadd.f32 %v1288, %v1258
        %v1290 = vrot.slane %v1289, 4
        %v1291 = vadd.f32 %v1289, %v1290
        %v1292 = vrot.slane %v1291, 2
        %v1293 = vadd.f32 %v1291, %v1292
        %v1294 = vrot.slane %v1293, 1
        %v1295 = vadd.f32 %v1293, %v1294
        %v1296 = vadd.f32 %v1226, %v1295
        %1297 = vst [vmem:[#allocation5] sm:$0x1] %v1296
        %p1298 = scmp.eq.s32.totalorder %s30, 1
        // Predicated region
        $region49: #{tpu_custom_call.1} parent=35 // pred_check
          %p1299 = pneg %p1298
        $region50: #{tpu_custom_call.1} parent=35 // pred_check_branch
          %1301 = sbr.rel (%p1299) target = $region52
        $region51: #{tpu_custom_call.1} parent=35 // pred_region
          %v1302 = vld [vmem:[#allocation3] sm:$0x1]
          %v1303 = vld [vmem:[#allocation4] sm:$0x1]
          %v1304 = vlog2.pop %v1303
          %v1305 = vmul.f32 %v1304, 0.6931472
          %v1306 = vadd.f32 %v1302, %v1305
          %v1307 = vld [vmem:[#allocation5] sm:$0x1]
          %v1308 = vsub.f32 %v1306, %v1307
          %1309 = vst [vmem:[%s278] sm:$0x1] %v1308
        $region52: #{tpu_custom_call.1} parent=35 // pred_fallthru
          _
        %s1310 = sand.u32 %s144, 1
        %s1311 = scalar_lea.sflag [#allocation9], %s1310
        %s1312 = sand.u32 %s144, 1
        %s1313 = scalar_lea.vmem [#allocation12], %s1312
        // Predicated region
        $region53: #{tpu_custom_call.1} parent=35 // pred_check
          %p1314 = pneg %p154
        $region54: #{tpu_custom_call.1} parent=35 // pred_check_branch
          %1316 = sbr.rel (%p1314) target = $region56
        $region55: #{tpu_custom_call.1} parent=35 // pred_region
          %s1318 = ssub.s32 16, 16
          %1319 = vsyncadd %s1311, %s1318
          %s1320 = smul.addr %s29, 16
          %s1321 = scalar_lea.hbm %s4, %s1320
          %s1323 = sshll.u32 %s1313, 4
          %s1324 = int_to_ptr.vmem [resolvable:$true] %s1323
          %1326 = dma.vmem_to_hbm [thread:$0]  %s1324, 16, %s1321, %s1311
        $region56: #{tpu_custom_call.1} parent=35 // pred_fallthru
          _
      $region36: #{tpu_custom_call.1} parent=5 // pred_fallthru
        _
      %p1327 = scmp.le.s32.totalorder 2, %s20
      // Predicated region
      $region57: #{tpu_custom_call.1} parent=5 // pred_check
        %p1328 = pneg %p1327
      $region58: #{tpu_custom_call.1} parent=5 // pred_check_branch
        %1330 = sbr.rel (%p1328) target = $region60
      $region59: #{tpu_custom_call.1} parent=5 // pred_region
        %s1331 = ssub.s32 %s20, 2
        // Predicated region
        $region61: #{tpu_custom_call.1} parent=59 // pred_check
          %p1332 = pneg %p160
        $region62: #{tpu_custom_call.1} parent=59 // pred_check_branch
          %1334 = sbr.rel (%p1332) target = $region64
        $region63: #{tpu_custom_call.1} parent=59 // pred_region
          %s1335 = sand.u32 %s145, 1
          %s1336 = scalar_lea.sflag [#allocation9], %s1335
          %s1337 = sand.u32 %s145, 1
          %s1338 = scalar_lea.vmem [#allocation12], %s1337
          %1339 = dma.done %s1336, 16
        $region64: #{tpu_custom_call.1} parent=59 // pred_fallthru
          _
      $region60: #{tpu_custom_call.1} parent=5 // pred_fallthru
        _
    $region6: #{tpu_custom_call.1} parent=1 // loop_footer
      %s24 = sadd.s32 1, %s20
    $region7: #{tpu_custom_call.1} parent=1 // loop_footer_branch
      %19 = sbr.rel target = $region3
    $region8: #{tpu_custom_call.1} parent=1 // loop_exit
      _
    %1340 = vsyncpa [#allocation8], 1
    %s1341 = scalar_lea.sflag [#allocation8], 1
    %1342 = vsyncpa %s1341, 1
    %1343 = vsyncpa [#allocation11], 1
    %s1344 = scalar_lea.sflag [#allocation11], 1
    %1345 = vsyncpa %s1344, 1
    %1346 = vsyncpa [#allocation9], 1
    %s1347 = scalar_lea.sflag [#allocation9], 1
    %1348 = vsyncpa %s1347, 1

</llo_original>
